<compile_context>
chip_gen: v7x
topology: tpu7x:2x2x1
jax: 0.10.0
libtpu: 0.0.40
codegen_flags: <defaults>
</compile_context>

<pallas_src>
import functools

import jax
import jax.numpy as jnp
import numpy as np
from jax.experimental import pallas as pl
from jax.experimental.pallas import tpu as pltpu


# ------------------------------ Pallas kernel -------------------------------
def _fused_mlp_kernel(idx_ref, w1f_ref, w2t_ref, b2_ref, w3t_ref, b3_ref,
                      w4t_ref, b4_ref, o_ref):
    f32 = jnp.float32
    tb = o_ref.shape[-1]                    # batch tile (lane axis)
    v = w1f_ref.shape[1]                    # stacked (padded) vocab size

    def dot(a, b):
        return jnp.dot(a, b, preferred_element_type=f32)

    # Packed indices: row 0 = idx_pat, row 1 = idx_meas + n_pat,
    # row 2 = idx_t + n_pat + n_meas  (offsets added on host).
    idx = idx_ref[...]                                           # (3, tb) int32

    # Stacked multi-hot over the concatenated vocab (exact 0/1 values, so the
    # matmul "gather" is bit-exact vs a real gather).
    # NOTE: an out-of-range index silently yields an all-zero segment instead
    # of raising like torch indexing.
    rows = jax.lax.broadcasted_iota(jnp.int32, (v, tb), 0)
    mh = ((rows == idx[0:1, :])
          | (rows == idx[1:2, :])
          | (rows == idx[2:3, :])).astype(f32)                   # (v, tb)

    # layer_1: tables + covariates + b1 are already folded into w1f on host.
    h = jnp.maximum(dot(w1f_ref[...], mh), 0.0)                  # (H1, tb)
    h = jnp.maximum(dot(w2t_ref[...], h) + b2_ref[...], 0.0)     # (H2, tb)
    h = jnp.maximum(dot(w3t_ref[...], h) + b3_ref[...], 0.0)     # (H3, tb)
    o_ref[...] = dot(w4t_ref[...], h) + b4_ref[...]              # (1, tb) lane-dense


# ------------------------------ Host wrapper ---------------------------------
def _choose_tile_b(B, tile_b):
    """Pick a lane-aligned batch tile.

    - Never over-pad tiny batches.
    - Guarantee >= 2 grid steps whenever the batch spans > 128 lanes so both
      v7x TensorCores get work (the batch axis is marked "parallel"); this
      costs at most one extra ~0.35us grid step on v5e/v6e.
    """
    lane = 128
    b_lane = -(-B // lane) * lane
    t = min(int(tile_b), b_lane)
    if b_lane > lane:
        t = min(t, -(-b_lane // (2 * lane)) * lane)
    return max(t, lane)


def deep_tensor_fact_forward(p, idx_pat, idx_meas, idx_t, tile_b=1024):
    """Fused multi-hot gather + 4-layer MLP forward.  Returns (B,) f32."""
    B = int(idx_pat.shape[0])
    tile_b = _choose_tile_b(B, tile_b)
    b_pad = int(pl.cdiv(B, tile_b)) * tile_b
    grid = (b_pad // tile_b,)

    # Pack the three index vectors into one (3, b_pad) int32 array with the
    # vocab offsets of the stacked layer-1 matrix pre-added.
    idx = jnp.stack([jnp.asarray(idx_pat, jnp.int32),
                     jnp.asarray(idx_meas, jnp.int32) + p.n_pat,
                     jnp.asarray(idx_t, jnp.int32) + p.n_pat + p.n_meas],
                    axis=0)
    idx = jnp.pad(idx, ((0, 0), (0, b_pad - B)))          # padded cols -> garbage, sliced off

    params = (p.w1_fold, p.w2_t, p.b2_t, p.w3_t, p.b3_t, p.w4_t, p.b4_t)

    idx_spec = pl.BlockSpec((3, tile_b), lambda i: (0, i))
    resident = lambda x: pl.BlockSpec(x.shape, lambda i: (0, 0))   # stays in VMEM
    in_specs = [idx_spec] + [resident(x) for x in params]
    out_spec = pl.BlockSpec((1, tile_b), lambda i: (0, i))

    # Advisory cost hint: true (unpadded) widths; params counted once per call.
    vocab = p.n_pat + p.n_meas + p.n_t
    flops = 2 * b_pad * (50 * vocab + 50 * 50 + 50 * 20 + 20 * 1)
    param_bytes = sum(int(np.prod(x.shape)) * 4 for x in params)
    bytes_accessed = 4 * (3 * b_pad + b_pad) + param_bytes

    out = pl.pallas_call(
        _fused_mlp_kernel,
        out_shape=jax.ShapeDtypeStruct((1, b_pad), jnp.float32),
        grid=grid,
        in_specs=in_specs,
        out_specs=out_spec,
        compiler_params=pltpu.CompilerParams(
            dimension_semantics=("parallel",),      # shards tiles across TCs on v7x
            vmem_limit_bytes=16 * 1024 * 1024,      # tiles + weights are << this
        ),
        cost_estimate=pl.CostEstimate(
            flops=flops, transcendentals=0, bytes_accessed=bytes_accessed),
    )(idx, *params)
    return out[0, :B]


def _pad2(x, shape):
    return jnp.pad(x, [(0, s - d) for d, s in zip(x.shape, shape)])


# ------------------------------ Module wrapper --------------------------------
class DeepTensorFactParams:
    """Deterministic parameter construction mirroring deep_tensor_fact.__init__."""

    # Hidden widths zero-padded to vreg-friendly sizes (true widths 50, 50, 20).
    H1, H2, H3 = 64, 64, 32

    def __init__(self, key, covariates, n_pat=10, n_meas=5, n_t=25,
                 l_dim=2, n_u=2, n_w=3):
        ks = jax.random.split(key, 8)
        self.n_pat, self.n_meas, self.n_t = n_pat, n_meas, n_t
        self.l_dim, self.n_u, self.n_w = l_dim, n_u, n_w

        # embeddings (same init scales as the torch module)
        self.pat_lat = 0.01 * jax.random.normal(ks[0], (n_pat, l_dim), jnp.float32)
        self.meas_lat = 0.01 * jax.random.normal(ks[1], (n_meas, l_dim), jnp.float32)
        self.time_lat = 0.005 * jax.random.normal(ks[2], (n_t, l_dim), jnp.float32)

        # fixed covariates
        self.covariates_u = covariates.astype(jnp.float32)               # (n_pat, n_u)
        self.cov_w_fixed = jnp.arange(n_t, dtype=jnp.float32)[:, None]   # (n_t, 1)
        # NOTE: the torch module declares n_w=3 but cov_w_fixed is (n_t, 1) and its
        # forward only concatenates that width-1 column, so the effective input
        # width is 3*l_dim + n_u + 1 (inherited from the torch module, documented).
        self.in_dim = 3 * l_dim + n_u + 1

        def linear(k, fan_in, fan_out):
            kw, kb = jax.random.split(k)
            bound = 1.0 / np.sqrt(fan_in)
            w = jax.random.uniform(kw, (fan_in, fan_out), jnp.float32, -bound, bound)
            b = jax.random.uniform(kb, (1, fan_out), jnp.float32, -bound, bound)
            return w, b

        self.w1, self.b1 = linear(ks[3], self.in_dim, 50)
        self.w2, self.b2 = linear(ks[4], 50, 50)
        self.w3, self.b3 = linear(ks[5], 50, 20)
        self.w4, self.b4 = linear(ks[6], 20, 1)

        # ---- Kernel-ready, constant-folded layer-1 matrix -------------------
        # z1^T = W1^T @ [pat; meas; time; cov_u; cov_w]^T + b1^T
        #      = W1_pat[:, ip] + W1_meas[:, im] + W1_time[:, it]
        # with the embedding tables, covariates and b1 folded in on the host.
        l, nu = l_dim, n_u
        w1T = self.w1.T                                              # (50, in_dim)
        seg_pat = (w1T[:, 0:l] @ self.pat_lat.T
                   + w1T[:, 3 * l:3 * l + nu] @ self.covariates_u.T
                   + self.b1.T)                                      # (50, n_pat)
        seg_meas = w1T[:, l:2 * l] @ self.meas_lat.T                 # (50, n_meas)
        seg_time = (w1T[:, 2 * l:3 * l] @ self.time_lat.T
                    + w1T[:, 3 * l + nu:3 * l + nu + 1] @ self.cov_w_fixed.T)  # (50, n_t)
        w1_fold = jnp.concatenate([seg_pat, seg_meas, seg_time], axis=1)       # (50, V)
        vocab = n_pat + n_meas + n_t
        v_pad = ((vocab + 7) // 8) * 8                               # sublane multiple
        self.w1_fold = _pad2(w1_fold, (self.H1, v_pad))              # (64, v_pad)

        # Remaining layers: transposed (features on sublanes), zero-padded to
        # the padded hidden widths; zero rows/cols + zero bias keep the padded
        # units exactly 0 through every ReLU.
        self.w2_t = _pad2(self.w2.T, (self.H2, self.H1))
        self.b2_t = _pad2(self.b2.T, (self.H2, 1))
        self.w3_t = _pad2(self.w3.T, (self.H3, self.H2))
        self.b3_t = _pad2(self.b3.T, (self.H3, 1))
        self.w4_t = _pad2(self.w4.T, (1, self.H3))
        self.b4_t = self.b4.T                                        # (1, 1)

    # Fused Pallas forward.
    def forward(self, idx_pat, idx_meas, idx_t, tile_b=1024):
        return deep_tensor_fact_forward(self, idx_pat, idx_meas, idx_t,
                                        tile_b=tile_b)

    # Pure-JAX reference (literal transcription of the torch forward).
    def forward_ref(self, idx_pat, idx_meas, idx_t):
        merged = jnp.concatenate(
            [self.pat_lat[idx_pat], self.meas_lat[idx_meas], self.time_lat[idx_t],
             self.covariates_u[idx_pat, :], self.cov_w_fixed[idx_t, :]], axis=1)
        h = jax.nn.relu(merged @ self.w1 + self.b1)
        h = jax.nn.relu(h @ self.w2 + self.b2)
        h = jax.nn.relu(h @ self.w3 + self.b3)
        return (h @ self.w4 + self.b4)[:, 0]


if __name__ == "__main__":
    key = jax.random.PRNGKey(0)
    k_cov, k_par, k_p, k_m, k_t = jax.random.split(key, 5)

    n_pat, n_meas, n_t, l_dim, n_u, n_w = 10, 5, 25, 2, 2, 3
    covariates = jax.random.normal(k_cov, (n_pat, n_u), jnp.float32)
    model = DeepTensorFactParams(k_par, covariates, n_pat=n_pat, n_meas=n_meas,
                                 n_t=n_t, l_dim=l_dim, n_u=n_u, n_w=n_w)

    # Small demo batch (single grid step).
    B = 8
    idx_pat = jax.random.randint(k_p, (B,), 0, n_pat, dtype=jnp.int32)
    idx_meas = jax.random.randint(k_m, (B,), 0, n_meas, dtype=jnp.int32)
    idx_t = jax.random.randint(k_t, (B,), 0, n_t, dtype=jnp.int32)

    out = jax.block_until_ready(model.forward(idx_pat, idx_meas, idx_t))
    ref = model.forward_ref(idx_pat, idx_meas, idx_t)
    assert out.shape == (B,)
    # Tolerance slightly looser than 1e-5: host-side constant folding + MXU
    # accumulation reassociate f32 additions vs the plain-JAX reference.
    np.testing.assert_allclose(np.asarray(out), np.asarray(ref),
                               rtol=2e-4, atol=2e-4)

    # Larger batch exercising the multi-tile grid (>=2 parallel steps) and the
    # batch-padding path.
    B2 = 300
    kp2, km2, kt2 = jax.random.split(jax.random.PRNGKey(1), 3)
    idx_pat2 = jax.random.randint(kp2, (B2,), 0, n_pat, dtype=jnp.int32)
    idx_meas2 = jax.random.randint(km2, (B2,), 0, n_meas, dtype=jnp.int32)
    idx_t2 = jax.random.randint(kt2, (B2,), 0, n_t, dtype=jnp.int32)

    out2 = jax.block_until_ready(model.forward(idx_pat2, idx_meas2, idx_t2))
    ref2 = model.forward_ref(idx_pat2, idx_meas2, idx_t2)
    assert out2.shape == (B2,)
    np.testing.assert_allclose(np.asarray(out2), np.asarray(ref2),
                               rtol=2e-4, atol=2e-4)

    print("KERNEL_OK")
</pallas_src>

<mosaic_0001>
module attributes {stable_mosaic.version = 11 : i64} {
  func.func @_fused_mlp_kernel(%arg0: i32, %arg1: memref<3x128xi32, #tpu.memory_space<vmem>>, %arg2: memref<64x40xf32, #tpu.memory_space<vmem>>, %arg3: memref<64x64xf32, #tpu.memory_space<vmem>>, %arg4: memref<64x1xf32, #tpu.memory_space<vmem>>, %arg5: memref<32x64xf32, #tpu.memory_space<vmem>>, %arg6: memref<32x1xf32, #tpu.memory_space<vmem>>, %arg7: memref<1x32xf32, #tpu.memory_space<vmem>>, %arg8: memref<1x1xf32, #tpu.memory_space<vmem>>, %arg9: memref<1x128xf32, #tpu.memory_space<vmem>>) attributes {dimension_semantics = [#tpu.dimension_semantics<parallel>], iteration_bounds = array<i64: 1>, scalar_prefetch = 0 : i64, scratch_operands = 0 : i64, tpu.core_type = #tpu.core_type<tc>, window_params = [{transform_indices = @transform_0, window_bounds = array<i64: 3, 128>}, {pipeline_mode = #tpu.pipeline_mode<synchronous>, transform_indices = @transform_1, window_bounds = array<i64: 64, 40>}, {pipeline_mode = #tpu.pipeline_mode<synchronous>, transform_indices = @transform_2, window_bounds = array<i64: 64, 64>}, {pipeline_mode = #tpu.pipeline_mode<synchronous>, transform_indices = @transform_3, window_bounds = array<i64: 64, 1>}, {pipeline_mode = #tpu.pipeline_mode<synchronous>, transform_indices = @transform_4, window_bounds = array<i64: 32, 64>}, {pipeline_mode = #tpu.pipeline_mode<synchronous>, transform_indices = @transform_5, window_bounds = array<i64: 32, 1>}, {pipeline_mode = #tpu.pipeline_mode<synchronous>, transform_indices = @transform_6, window_bounds = array<i64: 1, 32>}, {pipeline_mode = #tpu.pipeline_mode<synchronous>, transform_indices = @transform_7, window_bounds = array<i64: 1, 1>}, {transform_indices = @transform_8, window_bounds = array<i64: 1, 128>}]} {
    %c0 = arith.constant 0 : index
    %c0_0 = arith.constant 0 : index
    %0 = vector.load %arg1[%c0, %c0_0] : memref<3x128xi32, #tpu.memory_space<vmem>>, vector<3x128xi32>
    %1 = tpu.iota {dimensions = array<i32: 0>} : vector<40x128xi32>
    %2 = vector.extract_strided_slice %0 {offsets = [0, 0], sizes = [1, 128], strides = [1, 1]} : vector<3x128xi32> to vector<1x128xi32>
    %3 = vector.broadcast %2 : vector<1x128xi32> to vector<40x128xi32>
    %4 = arith.cmpi eq, %1, %3 : vector<40x128xi32>
    %5 = vector.extract_strided_slice %0 {offsets = [1, 0], sizes = [1, 128], strides = [1, 1]} : vector<3x128xi32> to vector<1x128xi32>
    %6 = vector.broadcast %5 : vector<1x128xi32> to vector<40x128xi32>
    %7 = arith.cmpi eq, %1, %6 : vector<40x128xi32>
    %8 = arith.ori %4, %7 : vector<40x128xi1>
    %9 = vector.extract_strided_slice %0 {offsets = [2, 0], sizes = [1, 128], strides = [1, 1]} : vector<3x128xi32> to vector<1x128xi32>
    %10 = vector.broadcast %9 : vector<1x128xi32> to vector<40x128xi32>
    %11 = arith.cmpi eq, %1, %10 : vector<40x128xi32>
    %12 = arith.ori %8, %11 : vector<40x128xi1>
    %13 = arith.extui %12 : vector<40x128xi1> to vector<40x128xi32>
    %14 = arith.sitofp %13 : vector<40x128xi32> to vector<40x128xf32>
    %c0_1 = arith.constant 0 : index
    %c0_2 = arith.constant 0 : index
    %15 = vector.load %arg2[%c0_1, %c0_2] : memref<64x40xf32, #tpu.memory_space<vmem>>, vector<64x40xf32>
    %cst = arith.constant dense<0.000000e+00> : vector<64x128xf32>
    %16 = tpu.matmul %15, %14, %cst {dimension_numbers = #tpu.dot_dimension_numbers<[1], [0], [0], [1], [0, 0, 1, 1], [], []>} : vector<64x40xf32>, vector<40x128xf32>, vector<64x128xf32> -> vector<64x128xf32>
    %cst_3 = arith.constant 0.000000e+00 : f32
    %17 = vector.broadcast %cst_3 : f32 to vector<64x128xf32>
    %18 = arith.maximumf %16, %17 : vector<64x128xf32>
    %c0_4 = arith.constant 0 : index
    %c0_5 = arith.constant 0 : index
    %19 = vector.load %arg3[%c0_4, %c0_5] : memref<64x64xf32, #tpu.memory_space<vmem>>, vector<64x64xf32>
    %cst_6 = arith.constant dense<0.000000e+00> : vector<64x128xf32>
    %20 = tpu.matmul %19, %18, %cst_6 {dimension_numbers = #tpu.dot_dimension_numbers<[1], [0], [0], [1], [0, 0, 1, 1], [], []>} : vector<64x64xf32>, vector<64x128xf32>, vector<64x128xf32> -> vector<64x128xf32>
    %c0_7 = arith.constant 0 : index
    %c0_8 = arith.constant 0 : index
    %21 = vector.load %arg4[%c0_7, %c0_8] : memref<64x1xf32, #tpu.memory_space<vmem>>, vector<64x1xf32>
    %22 = vector.broadcast %21 : vector<64x1xf32> to vector<64x128xf32>
    %23 = arith.addf %20, %22 : vector<64x128xf32>
    %cst_9 = arith.constant 0.000000e+00 : f32
    %24 = vector.broadcast %cst_9 : f32 to vector<64x128xf32>
    %25 = arith.maximumf %23, %24 : vector<64x128xf32>
    %c0_10 = arith.constant 0 : index
    %c0_11 = arith.constant 0 : index
    %26 = vector.load %arg5[%c0_10, %c0_11] : memref<32x64xf32, #tpu.memory_space<vmem>>, vector<32x64xf32>
    %cst_12 = arith.constant dense<0.000000e+00> : vector<32x128xf32>
    %27 = tpu.matmul %26, %25, %cst_12 {dimension_numbers = #tpu.dot_dimension_numbers<[1], [0], [0], [1], [0, 0, 1, 1], [], []>} : vector<32x64xf32>, vector<64x128xf32>, vector<32x128xf32> -> vector<32x128xf32>
    %c0_13 = arith.constant 0 : index
    %c0_14 = arith.constant 0 : index
    %28 = vector.load %arg6[%c0_13, %c0_14] : memref<32x1xf32, #tpu.memory_space<vmem>>, vector<32x1xf32>
    %29 = vector.broadcast %28 : vector<32x1xf32> to vector<32x128xf32>
    %30 = arith.addf %27, %29 : vector<32x128xf32>
    %cst_15 = arith.constant 0.000000e+00 : f32
    %31 = vector.broadcast %cst_15 : f32 to vector<32x128xf32>
    %32 = arith.maximumf %30, %31 : vector<32x128xf32>
    %c0_16 = arith.constant 0 : index
    %c0_17 = arith.constant 0 : index
    %33 = vector.load %arg7[%c0_16, %c0_17] : memref<1x32xf32, #tpu.memory_space<vmem>>, vector<1x32xf32>
    %cst_18 = arith.constant dense<0.000000e+00> : vector<1x128xf32>
    %34 = tpu.matmul %33, %32, %cst_18 {dimension_numbers = #tpu.dot_dimension_numbers<[1], [0], [0], [1], [0, 0, 1, 1], [], []>} : vector<1x32xf32>, vector<32x128xf32>, vector<1x128xf32> -> vector<1x128xf32>
    %c0_19 = arith.constant 0 : index
    %c0_20 = arith.constant 0 : index
    %35 = vector.load %arg8[%c0_19, %c0_20] : memref<1x1xf32, #tpu.memory_space<vmem>>, vector<1x1xf32>
    %36 = vector.broadcast %35 : vector<1x1xf32> to vector<1x128xf32>
    %37 = arith.addf %34, %36 : vector<1x128xf32>
    %c0_21 = arith.constant 0 : index
    %c0_22 = arith.constant 0 : index
    %38 = vector.load %arg9[%c0_21, %c0_22] : memref<1x128xf32, #tpu.memory_space<vmem>>, vector<1x128xf32>
    tpu.vector_store %arg9[%c0_21, %c0_22], %37 {strides = array<i32>} : memref<1x128xf32, #tpu.memory_space<vmem>>, vector<1x128xf32>,
    return
  }
  func.func @transform_0(%arg0: i32) -> (i32, i32) {
    %c0_i32 = arith.constant 0 : i32
    %c0_i32_0 = arith.constant 0 : i32
    return %c0_i32, %arg0 : i32, i32
  }
  func.func @transform_1(%arg0: i32) -> (i32, i32) {
    %c0_i32 = arith.constant 0 : i32
    %c0_i32_0 = arith.constant 0 : i32
    %c0_i32_1 = arith.constant 0 : i32
    return %c0_i32, %c0_i32_0 : i32, i32
  }
  func.func @transform_2(%arg0: i32) -> (i32, i32) {
    %c0_i32 = arith.constant 0 : i32
    %c0_i32_0 = arith.constant 0 : i32
    %c0_i32_1 = arith.constant 0 : i32
    return %c0_i32, %c0_i32_0 : i32, i32
  }
  func.func @transform_3(%arg0: i32) -> (i32, i32) {
    %c0_i32 = arith.constant 0 : i32
    %c0_i32_0 = arith.constant 0 : i32
    %c0_i32_1 = arith.constant 0 : i32
    return %c0_i32, %c0_i32_0 : i32, i32
  }
  func.func @transform_4(%arg0: i32) -> (i32, i32) {
    %c0_i32 = arith.constant 0 : i32
    %c0_i32_0 = arith.constant 0 : i32
    %c0_i32_1 = arith.constant 0 : i32
    return %c0_i32, %c0_i32_0 : i32, i32
  }
  func.func @transform_5(%arg0: i32) -> (i32, i32) {
    %c0_i32 = arith.constant 0 : i32
    %c0_i32_0 = arith.constant 0 : i32
    %c0_i32_1 = arith.constant 0 : i32
    return %c0_i32, %c0_i32_0 : i32, i32
  }
  func.func @transform_6(%arg0: i32) -> (i32, i32) {
    %c0_i32 = arith.constant 0 : i32
    %c0_i32_0 = arith.constant 0 : i32
    %c0_i32_1 = arith.constant 0 : i32
    return %c0_i32, %c0_i32_0 : i32, i32
  }
  func.func @transform_7(%arg0: i32) -> (i32, i32) {
    %c0_i32 = arith.constant 0 : i32
    %c0_i32_0 = arith.constant 0 : i32
    %c0_i32_1 = arith.constant 0 : i32
    return %c0_i32, %c0_i32_0 : i32, i32
  }
  func.func @transform_8(%arg0: i32) -> (i32, i32) {
    %c0_i32 = arith.constant 0 : i32
    %c0_i32_0 = arith.constant 0 : i32
    return %c0_i32, %arg0 : i32, i32
  }
}

</mosaic_0001>

<llo_original>
// kernel: tpu_custom_call.1
$region0: #{tpu_custom_call.1}
  #allocation0 [shape = 'u32[]', space=smem, size = 0x4, offset = 0x4, fixed_abs, tag = 'smem constant byte address 0x4 - core index']
  #allocation1 [shape = 'u32[144,128]{1,0:T(1,128)}', space=vmem, size = 0x12000, scoped, tag = 'internal scratch']
  #allocation2 [shape = 'f32[1,1]{1,0:T(1,128)S(1)}', space=vmem, size = 0x200, scoped, tag = 'scoped memory for tpu_custom_call.1']
  %s0 = inlined_call_operand.vmem [shape: s32[3,128], index: 0, kind: input, shape index: {}]
  %s1 = inlined_call_operand.vmem [shape: f32[64,40], index: 1, kind: input, shape index: {}]
  %s2 = inlined_call_operand.vmem [shape: f32[64,64], index: 2, kind: input, shape index: {}]
  %s3 = inlined_call_operand.vmem [shape: f32[64,1], index: 3, kind: input, shape index: {}]
  %s4 = inlined_call_operand.vmem [shape: f32[32,64], index: 4, kind: input, shape index: {}]
  %s5 = inlined_call_operand.vmem [shape: f32[32,1], index: 5, kind: input, shape index: {}]
  %s6 = inlined_call_operand.vmem [shape: f32[1,32], index: 6, kind: input, shape index: {}]
  %s7 = inlined_call_operand.<no memory space> [shape: f32[1,1], index: 7, kind: input, shape index: {}]
  %s8 = inlined_call_operand.hbm [shape: f32[1,128], index: 8, kind: output, shape index: {}]
  %s9 = sld [smem:[#allocation0]]
  $region42: #{tpu_custom_call.1} parent=0
    _
  %s11 = ssub.s32 1, %s9
  %s12 = scalar_select 0, %s11, %s9
  %v13 = vstv %s7
  %14 = vst [vmem:[#allocation2] sm:$0x1] %v13
  $region1: #{tpu_custom_call.1} parent=0
    #allocation3 [shape = 'u8[512]{0}', space=vmem, size = 0x400, scoped, tag = 'output window, operand 0, single buffered']
    #allocation4 [shape = 's32[1]{0}', space=sflag, size = 0x4, scoped, tag = 'scoped memory for tpu_custom_call.1']
    %15 = vsyncpa [#allocation4], 0
    // Predicated region
    $region2: #{tpu_custom_call.1} parent=1 // pred_check
      _
    $region3: #{tpu_custom_call.1} parent=1 // pred_check_branch
      %17 = sbr.rel (0) target = $region5
    $region4: #{tpu_custom_call.1} parent=1 // pred_region
      _
    $region5: #{tpu_custom_call.1} parent=1 // pred_fallthru
      _
    // Predicated region
    $region6: #{tpu_custom_call.1} parent=1 // pred_check
      _
    $region7: #{tpu_custom_call.1} parent=1 // pred_check_branch
      %19 = sbr.rel (0) target = $region9
    $region8: #{tpu_custom_call.1} parent=1 // pred_region
      _
    $region9: #{tpu_custom_call.1} parent=1 // pred_fallthru
      _
    // Predicated region
    $region10: #{tpu_custom_call.1} parent=1 // pred_check
      _
    $region11: #{tpu_custom_call.1} parent=1 // pred_check_branch
      %21 = sbr.rel (0) target = $region13
    $region12: #{tpu_custom_call.1} parent=1 // pred_region
      _
    $region13: #{tpu_custom_call.1} parent=1 // pred_fallthru
      _
    // Predicated region
    $region14: #{tpu_custom_call.1} parent=1 // pred_check
      _
    $region15: #{tpu_custom_call.1} parent=1 // pred_check_branch
      %23 = sbr.rel (0) target = $region17
    $region16: #{tpu_custom_call.1} parent=1 // pred_region
      _
    $region17: #{tpu_custom_call.1} parent=1 // pred_fallthru
      _
    // Predicated region
    $region18: #{tpu_custom_call.1} parent=1 // pred_check
      _
    $region19: #{tpu_custom_call.1} parent=1 // pred_check_branch
      %25 = sbr.rel (0) target = $region21
    $region20: #{tpu_custom_call.1} parent=1 // pred_region
      _
    $region21: #{tpu_custom_call.1} parent=1 // pred_fallthru
      _
    // Predicated region
    $region22: #{tpu_custom_call.1} parent=1 // pred_check
      _
    $region23: #{tpu_custom_call.1} parent=1 // pred_check_branch
      %27 = sbr.rel (0) target = $region25
    $region24: #{tpu_custom_call.1} parent=1 // pred_region
      _
    $region25: #{tpu_custom_call.1} parent=1 // pred_fallthru
      _
    // Predicated region
    $region26: #{tpu_custom_call.1} parent=1 // pred_check
      _
    $region27: #{tpu_custom_call.1} parent=1 // pred_check_branch
      %29 = sbr.rel (0) target = $region29
    $region28: #{tpu_custom_call.1} parent=1 // pred_region
      _
    $region29: #{tpu_custom_call.1} parent=1 // pred_fallthru
      _
    // Predicated region
    $region30: #{tpu_custom_call.1} parent=1 // pred_check
      _
    $region31: #{tpu_custom_call.1} parent=1 // pred_check_branch
      %31 = sbr.rel (0) target = $region33
    $region32: #{tpu_custom_call.1} parent=1 // pred_region
      _
    $region33: #{tpu_custom_call.1} parent=1 // pred_fallthru
      _
    %v32 = vld [vmem:[%s0] sm:$0x7]
    %v33 = vlaneseq
    %v34 = vshrl.u32 %v33, 7
    %v35 = vadd.s32 %v34, 8
    %v36 = vadd.s32 %v34, 16
    %v37 = vadd.s32 %v34, 24
    %v38 = vadd.s32 %v34, 32
    %v39 = vlaneseq
    %v40 = vshrl.u32 %v39, 7
    %v41 = vsub.s32 0, %v40
    %v42 = vrot.slane %v32, %v41
    %vm43 = vcmp.eq.s32.totalorder %v34, %v42
    %vm44 = vcmp.eq.s32.totalorder %v35, %v42
    %vm45 = vcmp.eq.s32.totalorder %v36, %v42
    %vm46 = vcmp.eq.s32.totalorder %v37, %v42
    %vm47 = vcmp.eq.s32.totalorder %v38, %v42
    %v48 = vlaneseq
    %v49 = vshrl.u32 %v48, 7
    %v50 = vsub.s32 1, %v49
    %v51 = vrot.slane %v32, %v50
    %vm52 = vcmp.eq.s32.totalorder %v34, %v51
    %vm53 = vcmp.eq.s32.totalorder %v35, %v51
    %vm54 = vcmp.eq.s32.totalorder %v36, %v51
    %vm55 = vcmp.eq.s32.totalorder %v37, %v51
    %vm56 = vcmp.eq.s32.totalorder %v38, %v51
    %vm57 = vmor %vm43, %vm52
    %vm58 = vmor %vm44, %vm53
    %vm59 = vmor %vm45, %vm54
    %vm60 = vmor %vm46, %vm55
    %vm61 = vmor %vm47, %vm56
    %v62 = vlaneseq
    %v63 = vshrl.u32 %v62, 7
    %v64 = vsub.s32 2, %v63
    %v65 = vrot.slane %v32, %v64
    %vm66 = vcmp.eq.s32.totalorder %v34, %v65
    %vm67 = vcmp.eq.s32.totalorder %v35, %v65
    %vm68 = vcmp.eq.s32.totalorder %v36, %v65
    %vm69 = vcmp.eq.s32.totalorder %v37, %v65
    %vm70 = vcmp.eq.s32.totalorder %v38, %v65
    %vm71 = vmor %vm57, %vm66
    %vm72 = vmor %vm58, %vm67
    %vm73 = vmor %vm59, %vm68
    %vm74 = vmor %vm60, %vm69
    %vm75 = vmor %vm61, %vm70
    %v76 = vsel %vm71, 1, 0
    %v77 = vsel %vm72, 1, 0
    %v78 = vsel %vm73, 1, 0
    %v79 = vsel %vm74, 1, 0
    %v80 = vsel %vm75, 1, 0
    %v81 = vcvt.s32.f32 %v76
    %v82 = vcvt.s32.f32 %v77
    %v83 = vcvt.s32.f32 %v78
    %v84 = vcvt.s32.f32 %v79
    %v85 = vcvt.s32.f32 %v80
    %v86 = vld [vmem:[%s1] sm:$0xff]
    %v87 = vld [vmem:[%s1 + $0x8] sm:$0xff]
    %v88 = vld [vmem:[%s1 + $0x10] sm:$0xff]
    %v89 = vld [vmem:[%s1 + $0x18] sm:$0xff]
    %v90 = vld [vmem:[%s1 + $0x20] sm:$0xff]
    %v91 = vld [vmem:[%s1 + $0x28] sm:$0xff]
    %v92 = vld [vmem:[%s1 + $0x30] sm:$0xff]
    %v93 = vld [vmem:[%s1 + $0x38] sm:$0xff]
    %vm94 = vcmask 326656
    %v96 = vsel %vm94, %v86, 0
    %v99 = vsel %vm94, %v87, 0
    %v102 = vsel %vm94, %v88, 0
    %v105 = vsel %vm94, %v89, 0
    %v108 = vsel %vm94, %v90, 0
    %v111 = vsel %vm94, %v91, 0
    %v114 = vsel %vm94, %v92, 0
    %v117 = vsel %vm94, %v93, 0
    %119 = vmatprep.subr.mxu0 0.0
    %120 = vmatpush1.msra.mxu0 %v81
    %121 = vmatprep.subr.mxu0 0.0
    %122 = vmatpush1.msra.mxu0 %v82
    %123 = vmatprep.subr.mxu0 0.0
    %124 = vmatpush1.msra.mxu0 %v83
    %125 = vmatprep.subr.mxu0 0.0
    %126 = vmatpush1.msra.mxu0 %v84
    %127 = vmatprep.subr.mxu0 0.0
    %128 = vmatpush1.msra.mxu0 %v85
    %129 = vmatprep.subr.mxu0 0.0
    %130 = vmatpush1.msra.mxu0 0.0
    %131 = vmatprep.subr.mxu0 0.0
    %132 = vmatpush1.msra.mxu0 0.0
    %133 = vmatprep.subr.mxu0 0.0
    %134 = vmatpush1.msra.mxu0 0.0
    %135 = vmatprep.subr.mxu0 0.0
    %136 = vmatpush1.msra.mxu0 0.0
    %137 = vmatprep.subr.mxu0 0.0
    %138 = vmatpush1.msra.mxu0 0.0
    %139 = vmatprep.subr.mxu0 0.0
    %140 = vmatpush1.msra.mxu0 0.0
    %141 = vmatprep.subr.mxu0 0.0
    %142 = vmatpush1.msra.mxu0 0.0
    %143 = vmatprep.subr.mxu0 0.0
    %144 = vmatpush1.msra.mxu0 0.0
    %145 = vmatprep.subr.mxu0 0.0
    %146 = vmatpush1.msra.mxu0 0.0
    %147 = vmatprep.subr.mxu0 0.0
    %148 = vmatpush1.msra.mxu0 0.0
    %149 = vmatprep.subr.mxu0 0.0
    %150 = vmatpush1.msra.mxu0 0.0
    %151 = vmatprep.subr.mxu0 0.0
    %152 = vmatpush1.msra.mxu0 0.0
    %153 = vmatprep.subr.mxu0 0.0
    %154 = vmatpush1.msra.mxu0 0.0
    %155 = vmatprep.subr.mxu0 0.0
    %156 = vmatpush1.msra.mxu0 0.0
    %157 = vmatprep.subr.mxu0 0.0
    %158 = vmatpush1.msra.mxu0 0.0
    %159 = vmatprep.subr.mxu0 0.0
    %160 = vmatpush1.msra.mxu0 0.0
    %161 = vmatprep.subr.mxu0 0.0
    %162 = vmatpush1.msra.mxu0 0.0
    %163 = vmatprep.subr.mxu0 0.0
    %164 = vmatpush1.msra.mxu0 0.0
    %165 = vmatprep.subr.mxu0 0.0
    %166 = vmatpush1.msra.mxu0 0.0
    %167 = vmatprep.subr.mxu0 0.0
    %168 = vmatpush1.msra.mxu0 0.0
    %169 = vmatprep.subr.mxu0 0.0
    %170 = vmatpush1.msra.mxu0 0.0
    %171 = vmatprep.subr.mxu0 0.0
    %172 = vmatpush1.msra.mxu0 0.0
    %173 = vmatprep.subr.mxu0 0.0
    %174 = vmatpush1.msra.mxu0 0.0
    %175 = vmatprep.subr.mxu0 0.0
    %176 = vmatpush1.msra.mxu0 0.0
    %177 = vmatprep.subr.mxu0 0.0
    %178 = vmatpush1.msra.mxu0 0.0
    %179 = vmatprep.subr.mxu0 0.0
    %180 = vmatpush1.msra.mxu0 0.0
    %181 = vmatprep.subr.mxu0 0.0
    %182 = vmatpush1.msra.mxu0 0.0
    %183 = vmatprep.mubr.f32.mxu0 0.0
    %184 = vmatmul.mubr.f32.gmra.mrb[0].mxu0 %v96
    %v185 = vpop.f32.mrb[0].mxu0
    %v186 = vadd.f32 0.0, %v185
    %v187 = vpop.f32.mrb[0].mxu0
    %188 = vmatprep.mubr.f32.mxu0 0.0
    %189 = vmatmul.mubr.f32.gmra.mrb[0].mxu0 %v99
    %v190 = vpop.f32.mrb[0].mxu0
    %v191 = vadd.f32 0.0, %v190
    %v192 = vpop.f32.mrb[0].mxu0
    %193 = vmatprep.mubr.f32.mxu0 0.0
    %194 = vmatmul.mubr.f32.gmra.mrb[0].mxu0 %v102
    %v195 = vpop.f32.mrb[0].mxu0
    %v196 = vadd.f32 0.0, %v195
    %v197 = vpop.f32.mrb[0].mxu0
    %198 = vmatprep.mubr.f32.mxu0 0.0
    %199 = vmatmul.mubr.f32.gmra.mrb[0].mxu0 %v105
    %v200 = vpop.f32.mrb[0].mxu0
    %v201 = vadd.f32 0.0, %v200
    %v202 = vpop.f32.mrb[0].mxu0
    %203 = vmatprep.mubr.f32.mxu0 0.0
    %204 = vmatmul.mubr.f32.gmra.mrb[0].mxu0 %v108
    %v205 = vpop.f32.mrb[0].mxu0
    %v206 = vadd.f32 0.0, %v205
    %v207 = vpop.f32.mrb[0].mxu0
    %208 = vmatprep.mubr.f32.mxu0 0.0
    %209 = vmatmul.mubr.f32.gmra.mrb[0].mxu0 %v111
    %v210 = vpop.f32.mrb[0].mxu0
    %v211 = vadd.f32 0.0, %v210
    %v212 = vpop.f32.mrb[0].mxu0
    %213 = vmatprep.mubr.f32.mxu0 0.0
    %214 = vmatmul.mubr.f32.gmra.mrb[0].mxu0 %v114
    %v215 = vpop.f32.mrb[0].mxu0
    %v216 = vadd.f32 0.0, %v215
    %v217 = vpop.f32.mrb[0].mxu0
    %218 = vmatprep.mubr.f32.mxu0 0.0
    %219 = vmatmul.mubr.f32.gmra.mrb[0].mxu0 %v117
    %v220 = vpop.f32.mrb[0].mxu0
    %v221 = vadd.f32 0.0, %v220
    %v222 = vpop.f32.mrb[0].mxu0
    %223 = vdwg.mxu0
    %v224 = vmax.f32 %v186, 0.0
    %v225 = vmax.f32 %v191, 0.0
    %v226 = vmax.f32 %v196, 0.0
    %v227 = vmax.f32 %v201, 0.0
    %v228 = vmax.f32 %v206, 0.0
    %v229 = vmax.f32 %v211, 0.0
    %v230 = vmax.f32 %v216, 0.0
    %v231 = vmax.f32 %v221, 0.0
    %v232 = vld [vmem:[%s2] sm:$0xff]
    %v233 = vld [vmem:[%s2 + $0x8] sm:$0xff]
    %v234 = vld [vmem:[%s2 + $0x10] sm:$0xff]
    %v235 = vld [vmem:[%s2 + $0x18] sm:$0xff]
    %v236 = vld [vmem:[%s2 + $0x20] sm:$0xff]
    %v237 = vld [vmem:[%s2 + $0x28] sm:$0xff]
    %v238 = vld [vmem:[%s2 + $0x30] sm:$0xff]
    %v239 = vld [vmem:[%s2 + $0x38] sm:$0xff]
    %v240 = vld [vmem:[%s3] sm:$0xff]
    %v241 = vld [vmem:[%s3 + $0x8] sm:$0xff]
    %v242 = vld [vmem:[%s3 + $0x10] sm:$0xff]
    %v243 = vld [vmem:[%s3 + $0x18] sm:$0xff]
    %v244 = vld [vmem:[%s3 + $0x20] sm:$0xff]
    %v245 = vld [vmem:[%s3 + $0x28] sm:$0xff]
    %v246 = vld [vmem:[%s3 + $0x30] sm:$0xff]
    %v247 = vld [vmem:[%s3 + $0x38] sm:$0xff]
    %249 = vset.pattern.permute.xlu0 0
    %250 = vperm.xlu0 %249, %v240
    %v251 = vpop.permute.xlu0 %250
    %254 = vset.pattern.permute.xlu0 0
    %255 = vperm.xlu0 %254, %v241
    %v256 = vpop.permute.xlu0 %255
    %259 = vset.pattern.permute.xlu0 0
    %260 = vperm.xlu0 %259, %v242
    %v261 = vpop.permute.xlu0 %260
    %264 = vset.pattern.permute.xlu0 0
    %265 = vperm.xlu0 %264, %v243
    %v266 = vpop.permute.xlu0 %265
    %269 = vset.pattern.permute.xlu0 0
    %270 = vperm.xlu0 %269, %v244
    %v271 = vpop.permute.xlu0 %270
    %274 = vset.pattern.permute.xlu0 0
    %275 = vperm.xlu0 %274, %v245
    %v276 = vpop.permute.xlu0 %275
    %279 = vset.pattern.permute.xlu0 0
    %280 = vperm.xlu0 %279, %v246
    %v281 = vpop.permute.xlu0 %280
    %284 = vset.pattern.permute.xlu0 0
    %285 = vperm.xlu0 %284, %v247
    %v286 = vpop.permute.xlu0 %285
    %vm288 = vcmask 523264
    %v290 = vsel %vm288, %v232, 0
    %v293 = vsel %vm288, %v233, 0
    %v296 = vsel %vm288, %v234, 0
    %v299 = vsel %vm288, %v235, 0
    %v302 = vsel %vm288, %v236, 0
    %v305 = vsel %vm288, %v237, 0
    %v308 = vsel %vm288, %v238, 0
    %v311 = vsel %vm288, %v239, 0
    %313 = vmatprep.subr.mxu0 0.0
    %314 = vmatpush1.msra.mxu0 %v224
    %315 = vmatprep.subr.mxu0 0.0
    %316 = vmatpush1.msra.mxu0 %v225
    %317 = vmatprep.subr.mxu0 0.0
    %318 = vmatpush1.msra.mxu0 %v226
    %319 = vmatprep.subr.mxu0 0.0
    %320 = vmatpush1.msra.mxu0 %v227
    %321 = vmatprep.subr.mxu0 0.0
    %322 = vmatpush1.msra.mxu0 %v228
    %323 = vmatprep.subr.mxu0 0.0
    %324 = vmatpush1.msra.mxu0 %v229
    %325 = vmatprep.subr.mxu0 0.0
    %326 = vmatpush1.msra.mxu0 %v230
    %327 = vmatprep.subr.mxu0 0.0
    %328 = vmatpush1.msra.mxu0 %v231
    %329 = vmatprep.subr.mxu0 0.0
    %330 = vmatpush1.msra.mxu0 0.0
    %331 = vmatprep.subr.mxu0 0.0
    %332 = vmatpush1.msra.mxu0 0.0
    %333 = vmatprep.subr.mxu0 0.0
    %334 = vmatpush1.msra.mxu0 0.0
    %335 = vmatprep.subr.mxu0 0.0
    %336 = vmatpush1.msra.mxu0 0.0
    %337 = vmatprep.subr.mxu0 0.0
    %338 = vmatpush1.msra.mxu0 0.0
    %339 = vmatprep.subr.mxu0 0.0
    %340 = vmatpush1.msra.mxu0 0.0
    %341 = vmatprep.subr.mxu0 0.0
    %342 = vmatpush1.msra.mxu0 0.0
    %343 = vmatprep.subr.mxu0 0.0
    %344 = vmatpush1.msra.mxu0 0.0
    %345 = vmatprep.subr.mxu0 0.0
    %346 = vmatpush1.msra.mxu0 0.0
    %347 = vmatprep.subr.mxu0 0.0
    %348 = vmatpush1.msra.mxu0 0.0
    %349 = vmatprep.subr.mxu0 0.0
    %350 = vmatpush1.msra.mxu0 0.0
    %351 = vmatprep.subr.mxu0 0.0
    %352 = vmatpush1.msra.mxu0 0.0
    %353 = vmatprep.subr.mxu0 0.0
    %354 = vmatpush1.msra.mxu0 0.0
    %355 = vmatprep.subr.mxu0 0.0
    %356 = vmatpush1.msra.mxu0 0.0
    %357 = vmatprep.subr.mxu0 0.0
    %358 = vmatpush1.msra.mxu0 0.0
    %359 = vmatprep.subr.mxu0 0.0
    %360 = vmatpush1.msra.mxu0 0.0
    %361 = vmatprep.subr.mxu0 0.0
    %362 = vmatpush1.msra.mxu0 0.0
    %363 = vmatprep.subr.mxu0 0.0
    %364 = vmatpush1.msra.mxu0 0.0
    %365 = vmatprep.subr.mxu0 0.0
    %366 = vmatpush1.msra.mxu0 0.0
    %367 = vmatprep.subr.mxu0 0.0
    %368 = vmatpush1.msra.mxu0 0.0
    %369 = vmatprep.subr.mxu0 0.0
    %370 = vmatpush1.msra.mxu0 0.0
    %371 = vmatprep.subr.mxu0 0.0
    %372 = vmatpush1.msra.mxu0 0.0
    %373 = vmatprep.subr.mxu0 0.0
    %374 = vmatpush1.msra.mxu0 0.0
    %375 = vmatprep.subr.mxu0 0.0
    %376 = vmatpush1.msra.mxu0 0.0
    %377 = vmatprep.mubr.f32.mxu0 0.0
    %378 = vmatmul.mubr.f32.gmra.mrb[0].mxu0 %v290
    %v379 = vpop.f32.mrb[0].mxu0
    %v380 = vadd.f32 %v251, %v379
    %v381 = vpop.f32.mrb[0].mxu0
    %382 = vmatprep.mubr.f32.mxu0 0.0
    %383 = vmatmul.mubr.f32.gmra.mrb[0].mxu0 %v293
    %v384 = vpop.f32.mrb[0].mxu0
    %v385 = vadd.f32 %v256, %v384
    %v386 = vpop.f32.mrb[0].mxu0
    %387 = vmatprep.mubr.f32.mxu0 0.0
    %388 = vmatmul.mubr.f32.gmra.mrb[0].mxu0 %v296
    %v389 = vpop.f32.mrb[0].mxu0
    %v390 = vadd.f32 %v261, %v389
    %v391 = vpop.f32.mrb[0].mxu0
    %392 = vmatprep.mubr.f32.mxu0 0.0
    %393 = vmatmul.mubr.f32.gmra.mrb[0].mxu0 %v299
    %v394 = vpop.f32.mrb[0].mxu0
    %v395 = vadd.f32 %v266, %v394
    %v396 = vpop.f32.mrb[0].mxu0
    %397 = vmatprep.mubr.f32.mxu0 0.0
    %398 = vmatmul.mubr.f32.gmra.mrb[0].mxu0 %v302
    %v399 = vpop.f32.mrb[0].mxu0
    %v400 = vadd.f32 %v271, %v399
    %v401 = vpop.f32.mrb[0].mxu0
    %402 = vmatprep.mubr.f32.mxu0 0.0
    %403 = vmatmul.mubr.f32.gmra.mrb[0].mxu0 %v305
    %v404 = vpop.f32.mrb[0].mxu0
    %v405 = vadd.f32 %v276, %v404
    %v406 = vpop.f32.mrb[0].mxu0
    %407 = vmatprep.mubr.f32.mxu0 0.0
    %408 = vmatmul.mubr.f32.gmra.mrb[0].mxu0 %v308
    %v409 = vpop.f32.mrb[0].mxu0
    %v410 = vadd.f32 %v281, %v409
    %v411 = vpop.f32.mrb[0].mxu0
    %412 = vmatprep.mubr.f32.mxu0 0.0
    %413 = vmatmul.mubr.f32.gmra.mrb[0].mxu0 %v311
    %v414 = vpop.f32.mrb[0].mxu0
    %v415 = vadd.f32 %v286, %v414
    %v416 = vpop.f32.mrb[0].mxu0
    %417 = vdwg.mxu0
    %v418 = vmax.f32 %v380, 0.0
    %v419 = vmax.f32 %v385, 0.0
    %v420 = vmax.f32 %v390, 0.0
    %v421 = vmax.f32 %v395, 0.0
    %v422 = vmax.f32 %v400, 0.0
    %v423 = vmax.f32 %v405, 0.0
    %v424 = vmax.f32 %v410, 0.0
    %v425 = vmax.f32 %v415, 0.0
    %v426 = vld [vmem:[%s4] sm:$0xff]
    %v427 = vld [vmem:[%s4 + $0x8] sm:$0xff]
    %v428 = vld [vmem:[%s4 + $0x10] sm:$0xff]
    %v429 = vld [vmem:[%s4 + $0x18] sm:$0xff]
    %v430 = vld [vmem:[%s5] sm:$0xff]
    %v431 = vld [vmem:[%s5 + $0x8] sm:$0xff]
    %v432 = vld [vmem:[%s5 + $0x10] sm:$0xff]
    %v433 = vld [vmem:[%s5 + $0x18] sm:$0xff]
    %435 = vset.pattern.permute.xlu0 0
    %436 = vperm.xlu0 %435, %v430
    %v437 = vpop.permute.xlu0 %436
    %440 = vset.pattern.permute.xlu0 0
    %441 = vperm.xlu0 %440, %v431
    %v442 = vpop.permute.xlu0 %441
    %445 = vset.pattern.permute.xlu0 0
    %446 = vperm.xlu0 %445, %v432
    %v447 = vpop.permute.xlu0 %446
    %450 = vset.pattern.permute.xlu0 0
    %451 = vperm.xlu0 %450, %v433
    %v452 = vpop.permute.xlu0 %451
    %v455 = vsel %vm288, %v426, 0
    %v458 = vsel %vm288, %v427, 0
    %v461 = vsel %vm288, %v428, 0
    %v464 = vsel %vm288, %v429, 0
    %466 = vmatprep.subr.mxu0 0.0
    %467 = vmatpush1.msra.mxu0 %v418
    %468 = vmatprep.subr.mxu0 0.0
    %469 = vmatpush1.msra.mxu0 %v419
    %470 = vmatprep.subr.mxu0 0.0
    %471 = vmatpush1.msra.mxu0 %v420
    %472 = vmatprep.subr.mxu0 0.0
    %473 = vmatpush1.msra.mxu0 %v421
    %474 = vmatprep.subr.mxu0 0.0
    %475 = vmatpush1.msra.mxu0 %v422
    %476 = vmatprep.subr.mxu0 0.0
    %477 = vmatpush1.msra.mxu0 %v423
    %478 = vmatprep.subr.mxu0 0.0
    %479 = vmatpush1.msra.mxu0 %v424
    %480 = vmatprep.subr.mxu0 0.0
    %481 = vmatpush1.msra.mxu0 %v425
    %482 = vmatprep.subr.mxu0 0.0
    %483 = vmatpush1.msra.mxu0 0.0
    %484 = vmatprep.subr.mxu0 0.0
    %485 = vmatpush1.msra.mxu0 0.0
    %486 = vmatprep.subr.mxu0 0.0
    %487 = vmatpush1.msra.mxu0 0.0
    %488 = vmatprep.subr.mxu0 0.0
    %489 = vmatpush1.msra.mxu0 0.0
    %490 = vmatprep.subr.mxu0 0.0
    %491 = vmatpush1.msra.mxu0 0.0
    %492 = vmatprep.subr.mxu0 0.0
    %493 = vmatpush1.msra.mxu0 0.0
    %494 = vmatprep.subr.mxu0 0.0
    %495 = vmatpush1.msra.mxu0 0.0
    %496 = vmatprep.subr.mxu0 0.0
    %497 = vmatpush1.msra.mxu0 0.0
    %498 = vmatprep.subr.mxu0 0.0
    %499 = vmatpush1.msra.mxu0 0.0
    %500 = vmatprep.subr.mxu0 0.0
    %501 = vmatpush1.msra.mxu0 0.0
    %502 = vmatprep.subr.mxu0 0.0
    %503 = vmatpush1.msra.mxu0 0.0
    %504 = vmatprep.subr.mxu0 0.0
    %505 = vmatpush1.msra.mxu0 0.0
    %506 = vmatprep.subr.mxu0 0.0
    %507 = vmatpush1.msra.mxu0 0.0
    %508 = vmatprep.subr.mxu0 0.0
    %509 = vmatpush1.msra.mxu0 0.0
    %510 = vmatprep.subr.mxu0 0.0
    %511 = vmatpush1.msra.mxu0 0.0
    %512 = vmatprep.subr.mxu0 0.0
    %513 = vmatpush1.msra.mxu0 0.0
    %514 = vmatprep.subr.mxu0 0.0
    %515 = vmatpush1.msra.mxu0 0.0
    %516 = vmatprep.subr.mxu0 0.0
    %517 = vmatpush1.msra.mxu0 0.0
    %518 = vmatprep.subr.mxu0 0.0
    %519 = vmatpush1.msra.mxu0 0.0
    %520 = vmatprep.subr.mxu0 0.0
    %521 = vmatpush1.msra.mxu0 0.0
    %522 = vmatprep.subr.mxu0 0.0
    %523 = vmatpush1.msra.mxu0 0.0
    %524 = vmatprep.subr.mxu0 0.0
    %525 = vmatpush1.msra.mxu0 0.0
    %526 = vmatprep.subr.mxu0 0.0
    %527 = vmatpush1.msra.mxu0 0.0
    %528 = vmatprep.subr.mxu0 0.0
    %529 = vmatpush1.msra.mxu0 0.0
    %530 = vmatprep.mubr.f32.mxu0 0.0
    %531 = vmatmul.mubr.f32.gmra.mrb[0].mxu0 %v455
    %v532 = vpop.f32.mrb[0].mxu0
    %v533 = vadd.f32 %v437, %v532
    %v534 = vpop.f32.mrb[0].mxu0
    %535 = vmatprep.mubr.f32.mxu0 0.0
    %536 = vmatmul.mubr.f32.gmra.mrb[0].mxu0 %v458
    %v537 = vpop.f32.mrb[0].mxu0
    %v538 = vadd.f32 %v442, %v537
    %v539 = vpop.f32.mrb[0].mxu0
    %540 = vmatprep.mubr.f32.mxu0 0.0
    %541 = vmatmul.mubr.f32.gmra.mrb[0].mxu0 %v461
    %v542 = vpop.f32.mrb[0].mxu0
    %v543 = vadd.f32 %v447, %v542
    %v544 = vpop.f32.mrb[0].mxu0
    %545 = vmatprep.mubr.f32.mxu0 0.0
    %546 = vmatmul.mubr.f32.gmra.mrb[0].mxu0 %v464
    %v547 = vpop.f32.mrb[0].mxu0
    %v548 = vadd.f32 %v452, %v547
    %v549 = vpop.f32.mrb[0].mxu0
    %550 = vdwg.mxu0
    %v551 = vmax.f32 %v533, 0.0
    %v552 = vmax.f32 %v538, 0.0
    %v553 = vmax.f32 %v543, 0.0
    %v554 = vmax.f32 %v548, 0.0
    %v555 = vld [vmem:[%s6] sm:$0x1]
    %v556 = vld [vmem:[#allocation2] sm:$0x1]
    %558 = vset.pattern.permute.xlu0 0
    %559 = vperm.xlu0 %558, %v556
    %v560 = vpop.permute.xlu0 %559
    %v562 = vlaneseq
    %v563 = vshrl.u32 %v562, 7
    %v564 = vsub.s32 0, %v563
    %v565 = vrot.slane %v560, %v564
    %vm566 = vcmask 261120
    %v568 = vsel %vm566, %v555, 0
    %570 = vmatprep.subr.mxu0 0.0
    %571 = vmatpush1.msra.mxu0 %v551
    %572 = vmatprep.subr.mxu0 0.0
    %573 = vmatpush1.msra.mxu0 %v552
    %574 = vmatprep.subr.mxu0 0.0
    %575 = vmatpush1.msra.mxu0 %v553
    %576 = vmatprep.subr.mxu0 0.0
    %577 = vmatpush1.msra.mxu0 %v554
    %578 = vmatprep.subr.mxu0 0.0
    %579 = vmatpush1.msra.mxu0 0.0
    %580 = vmatprep.subr.mxu0 0.0
    %581 = vmatpush1.msra.mxu0 0.0
    %582 = vmatprep.subr.mxu0 0.0
    %583 = vmatpush1.msra.mxu0 0.0
    %584 = vmatprep.subr.mxu0 0.0
    %585 = vmatpush1.msra.mxu0 0.0
    %586 = vmatprep.subr.mxu0 0.0
    %587 = vmatpush1.msra.mxu0 0.0
    %588 = vmatprep.subr.mxu0 0.0
    %589 = vmatpush1.msra.mxu0 0.0
    %590 = vmatprep.subr.mxu0 0.0
    %591 = vmatpush1.msra.mxu0 0.0
    %592 = vmatprep.subr.mxu0 0.0
    %593 = vmatpush1.msra.mxu0 0.0
    %594 = vmatprep.subr.mxu0 0.0
    %595 = vmatpush1.msra.mxu0 0.0
    %596 = vmatprep.subr.mxu0 0.0
    %597 = vmatpush1.msra.mxu0 0.0
    %598 = vmatprep.subr.mxu0 0.0
    %599 = vmatpush1.msra.mxu0 0.0
    %600 = vmatprep.subr.mxu0 0.0
    %601 = vmatpush1.msra.mxu0 0.0
    %602 = vmatprep.subr.mxu0 0.0
    %603 = vmatpush1.msra.mxu0 0.0
    %604 = vmatprep.subr.mxu0 0.0
    %605 = vmatpush1.msra.mxu0 0.0
    %606 = vmatprep.subr.mxu0 0.0
    %607 = vmatpush1.msra.mxu0 0.0
    %608 = vmatprep.subr.mxu0 0.0
    %609 = vmatpush1.msra.mxu0 0.0
    %610 = vmatprep.subr.mxu0 0.0
    %611 = vmatpush1.msra.mxu0 0.0
    %612 = vmatprep.subr.mxu0 0.0
    %613 = vmatpush1.msra.mxu0 0.0
    %614 = vmatprep.subr.mxu0 0.0
    %615 = vmatpush1.msra.mxu0 0.0
    %616 = vmatprep.subr.mxu0 0.0
    %617 = vmatpush1.msra.mxu0 0.0
    %618 = vmatprep.subr.mxu0 0.0
    %619 = vmatpush1.msra.mxu0 0.0
    %620 = vmatprep.subr.mxu0 0.0
    %621 = vmatpush1.msra.mxu0 0.0
    %622 = vmatprep.subr.mxu0 0.0
    %623 = vmatpush1.msra.mxu0 0.0
    %624 = vmatprep.subr.mxu0 0.0
    %625 = vmatpush1.msra.mxu0 0.0
    %626 = vmatprep.subr.mxu0 0.0
    %627 = vmatpush1.msra.mxu0 0.0
    %628 = vmatprep.subr.mxu0 0.0
    %629 = vmatpush1.msra.mxu0 0.0
    %630 = vmatprep.subr.mxu0 0.0
    %631 = vmatpush1.msra.mxu0 0.0
    %632 = vmatprep.subr.mxu0 0.0
    %633 = vmatpush1.msra.mxu0 0.0
    %634 = vmatprep.mubr.f32.mxu0 0.0
    %635 = vmatmul.mubr.f32.gmra.mrb[0].mxu0 %v568
    %v636 = vpop.f32.mrb[0].mxu0
    %v637 = vadd.f32 %v565, %v636
    %v638 = vpop.f32.mrb[0].mxu0
    %639 = vdwg.mxu0
    %640 = vst [vmem:[#allocation3] sm:$0x1] %v637
    // Predicated region
    $region34: #{tpu_custom_call.1} parent=1 // pred_check
      _
    $region35: #{tpu_custom_call.1} parent=1 // pred_check_branch
      %642 = sbr.rel (0) target = $region37
    $region36: #{tpu_custom_call.1} parent=1 // pred_region
      %s644 = ssub.s32 16, 16
      %645 = vsyncadd [#allocation4], %s644
      %s647 = sshll.u32 [#allocation3], 4
      %s648 = int_to_ptr.vmem [resolvable:$true] %s647
      %650 = dma.vmem_to_hbm [thread:$0]  %s648, 16, %s8, [#allocation4]
    $region37: #{tpu_custom_call.1} parent=1 // pred_fallthru
      _
    // Predicated region
    $region38: #{tpu_custom_call.1} parent=1 // pred_check
      _
    $region39: #{tpu_custom_call.1} parent=1 // pred_check_branch
      %652 = sbr.rel (0) target = $region41
    $region40: #{tpu_custom_call.1} parent=1 // pred_region
      %653 = dma.done [#allocation4], 16
    $region41: #{tpu_custom_call.1} parent=1 // pred_fallthru
      _
    %654 = vsyncpa [#allocation4], 1

</llo_original>
